<compile_context>
chip_gen: v7x
topology: tpu7x:2x2x1
jax: 0.10.0
libtpu: 0.0.40
codegen_flags: <defaults>
</compile_context>

<pallas_src>
import jax
import jax.numpy as jnp
import numpy as np
from jax.experimental import pallas as pl
from jax.experimental.pallas import tpu as pltpu


def _round_up(x, m):
    return ((x + m - 1) // m) * m


def _elementwise_dtype():
    """bf16 BN/ReLU/pool math on chips with a packed-bf16 VALU (v6e/v7x), else f32."""
    try:
        kind = jax.devices()[0].device_kind.lower()
    except Exception:
        return jnp.float32
    if any(t in kind for t in ("v2", "v3", "v4", "v5")):
        return jnp.float32
    return jnp.bfloat16


def _pick_tq(mq, target):
    """Pooled-pixel tile size.

    Prefer an exact divisor of `mq` (no pad copy, no masked tail) that is a
    multiple of 16 (bf16 sublane packing) and keeps grid >= 2 so both v7x
    TensorCores get work.  Fall back to a ragged last tile (cdiv grid) rather
    than materializing a padded copy of the activations in HBM.
    """
    target = max(16, int(target))
    hi = min(target, mq // 2)
    start = hi - hi % 16
    for t in range(start, 15, -16):
        if mq % t == 0:
            return t
    if mq <= target:
        return mq                      # single full-extent tile (always legal)
    return target - target % 16        # ragged tail handled by cdiv grid


def _make_kernel(packed):
    """One tile of BN(folded, pool-scaled)+ReLU -> 2x2 avg-pool -> 1x1 conv (+bias).

    packed=True : x_ref is (Tq, 4*Cin)  -- window position folded into channels
    packed=False: x_ref is (4, Tq, Cin) -- window position on the leading axis
    scale/bias : (1, Cin)   folded BN scale/bias * 0.25 (f32 or bf16)
    w_ref      : (Cin, CoutP) bf16 1x1-conv weight, Cout padded lane-dense
    b_ref      : (1, CoutP) f32 conv bias
    o_ref      : (Tq, CoutP) bf16 pooled conv output
    """
    def kernel(x_ref, scale_ref, bias_ref, w_ref, b_ref, o_ref):
        tq = o_ref.shape[0]
        c = scale_ref.shape[-1]
        cdt = scale_ref.dtype
        # Hoist the (1,C)->(Tq,C) broadcasts out of the 4-position loop
        # (JAX does not CSE broadcast_in_dim).
        scale = jnp.broadcast_to(scale_ref[...], (tq, c))
        bias = jnp.broadcast_to(bias_ref[...], (tq, c))

        def pos(p):
            if packed:
                return x_ref[:, p * c:(p + 1) * c]   # static, lane-aligned when C%128==0
            return x_ref[p]

        # BN + ReLU per window position, accumulating the 2x2 average pool on
        # the fly.  The 1/4 pool factor is folded into scale/bias (ReLU commutes
        # with the positive constant), so no extra multiply here.
        acc = jnp.maximum(pos(0).astype(cdt) * scale + bias, 0.0)
        for p in range(1, 4):
            acc = acc + jnp.maximum(pos(p).astype(cdt) * scale + bias, 0.0)

        # 1x1 conv == channel matmul on the MXU; bf16 operands, f32 accumulation.
        # Pooling before the conv is exact (both linear, different axes) -> 4x
        # fewer MACs.  Conv bias after pooling is algebraically identical.
        z = jnp.dot(acc.astype(jnp.bfloat16), w_ref[...],
                    preferred_element_type=jnp.float32)
        o_ref[...] = (z + b_ref[...]).astype(o_ref.dtype)

    return kernel


@jax.jit
def transition_block_pallas(x_nchw, gamma, beta, conv_w, conv_b, eps=1e-5):
    N, C, H, W = x_nchw.shape
    Cout = conv_w.shape[0]
    assert H % 2 == 0 and W % 2 == 0
    Hq, Wq = H // 2, W // 2
    Mq = N * Hq * Wq

    # --- Single HBM pass over the f32 input: channels-last 2x2-window repack
    #     fused with the bf16 downcast.
    packed = (C % 128 == 0)   # lane-aligned per-position slices + contiguous DMA slabs
    xw = x_nchw.reshape(N, C, Hq, 2, Wq, 2)
    if packed:
        xb = jnp.transpose(xw, (0, 2, 4, 3, 5, 1)).astype(jnp.bfloat16)  # (N,Hq,Wq,2,2,C)
        x_in = xb.reshape(Mq, 4 * C)
    else:
        xb = jnp.transpose(xw, (3, 5, 0, 2, 4, 1)).astype(jnp.bfloat16)  # (2,2,N,Hq,Wq,C)
        x_in = xb.reshape(4, Mq, C)

    # --- BatchNorm2d training-mode batch statistics, computed from the bf16
    #     channels-last copy (half the stats bytes of re-reading the f32 NCHW
    #     input) with f32 accumulation.  reshape(-1, C) is a free view of xb.
    # TODO(synk): the batch mean/var is a global reduction that must finish
    # before normalization, so it lives in a fused XLA reduce, not the kernel.
    xs = xb.reshape(-1, C).astype(jnp.float32)
    cnt = float(N * H * W)
    mean = jnp.sum(xs, axis=0) / cnt
    var = jnp.sum(xs * xs, axis=0) / cnt - mean * mean    # biased var (PyTorch norm)
    inv_std = gamma.astype(jnp.float32) / jnp.sqrt(var + eps)

    # --- Fold BN scale/bias AND the 2x2 avg-pool 1/4 into one per-channel affine.
    cdt = _elementwise_dtype()
    scale2d = (0.25 * inv_std).reshape(1, C).astype(cdt)
    bias2d = (0.25 * (beta.astype(jnp.float32) - mean * inv_std)).reshape(1, C).astype(cdt)

    # --- Lane-dense output: pad Cout up to a multiple of 128 (zero cols, sliced off).
    CoutP = _round_up(Cout, 128)
    w2d = conv_w.reshape(Cout, C).T.astype(jnp.bfloat16)          # (Cin, Cout)
    w2d = jnp.pad(w2d, ((0, 0), (0, CoutP - Cout)))
    b2d = jnp.pad(conv_b.astype(jnp.float32).reshape(1, Cout),
                  ((0, 0), (0, CoutP - Cout)))

    # --- Tiling: Tq pooled pixels per grid step (target 1024), with the
    #     double-buffered working set budgeted at ~40 MiB so it also fits
    #     v7x's 64 MiB physical VMEM.
    per_row_bytes = 4 * C * 2 + CoutP * 2           # bf16 x row + bf16 out row
    budget = 40 * 1024 * 1024
    tq_cap = max(16, (budget // (2 * per_row_bytes)) // 16 * 16)
    Tq = _pick_tq(Mq, min(1024, tq_cap))
    grid = (pl.cdiv(Mq, Tq),)

    if packed:
        x_spec = pl.BlockSpec((Tq, 4 * C), lambda i: (i, 0))
    else:
        x_spec = pl.BlockSpec((4, Tq, C), lambda i: (0, i, 0))

    out2d = pl.pallas_call(
        _make_kernel(packed),
        out_shape=jax.ShapeDtypeStruct((Mq, CoutP), jnp.bfloat16),   # bf16 writeback
        grid_spec=pltpu.PrefetchScalarGridSpec(
            num_scalar_prefetch=0,
            grid=grid,
            in_specs=[
                x_spec,
                pl.BlockSpec((1, C), lambda i: (0, 0)),       # folded BN*pool scale
                pl.BlockSpec((1, C), lambda i: (0, 0)),       # folded BN*pool bias
                pl.BlockSpec((C, CoutP), lambda i: (0, 0)),   # 1x1 conv weight (resident)
                pl.BlockSpec((1, CoutP), lambda i: (0, 0)),   # conv bias
            ],
            out_specs=pl.BlockSpec((Tq, CoutP), lambda i: (i, 0)),
        ),
        compiler_params=pltpu.CompilerParams(
            dimension_semantics=("parallel",),
            # 48 MiB: under v7x's 64 MiB physical VMEM, plenty on v5e/v6e (128 MiB).
            vmem_limit_bytes=48 * 1024 * 1024,
        ),
    )(x_in, scale2d, bias2d, w2d, b2d)

    # --- glue: (Mq, CoutP) bf16 -> NCHW f32 (cast fused with the final transpose).
    out = out2d[:, :Cout].astype(jnp.float32).reshape(N, Hq, Wq, Cout)
    return jnp.transpose(out, (0, 3, 1, 2))


def transition_block_ref(x, gamma, beta, conv_w, conv_b, eps=1e-5):
    """Pure-JAX f32 reference with identical semantics (NCHW)."""
    mean = jnp.mean(x, axis=(0, 2, 3), keepdims=True)
    var = jnp.var(x, axis=(0, 2, 3), keepdims=True)
    y = (x - mean) / jnp.sqrt(var + eps)
    y = y * gamma.reshape(1, -1, 1, 1) + beta.reshape(1, -1, 1, 1)
    y = jnp.maximum(y, 0.0)
    w = conv_w.reshape(conv_w.shape[0], conv_w.shape[1])
    z = jnp.einsum('nchw,oc->nohw', y, w) + conv_b.reshape(1, -1, 1, 1)
    N, Co, H, W = z.shape
    return z.reshape(N, Co, H // 2, 2, W // 2, 2).mean(axis=(3, 5))


if __name__ == "__main__":
    key = jax.random.PRNGKey(0)
    k1, k2, k3, k4, k5 = jax.random.split(key, 5)

    # --- Test 1: small shapes straight from the module spec (C not lane-aligned
    #     -> exercises the (4, Mq, C) layout path).
    N, Cin, H, W = 2, 4, 16, 16
    compression_factor = 0.5
    Cout = int(Cin * compression_factor)

    x = jax.random.normal(k1, (N, Cin, H, W), dtype=jnp.float32)
    gamma = 1.0 + 0.1 * jax.random.normal(k2, (Cin,), dtype=jnp.float32)   # bn.weight
    beta = 0.1 * jax.random.normal(k3, (Cin,), dtype=jnp.float32)          # bn.bias
    conv_w = 0.5 * jax.random.normal(k4, (Cout, Cin, 1, 1), dtype=jnp.float32)
    conv_b = 0.1 * jax.random.normal(k5, (Cout,), dtype=jnp.float32)

    out = transition_block_pallas(x, gamma, beta, conv_w, conv_b)
    out = jax.block_until_ready(out)
    ref = transition_block_ref(x, gamma, beta, conv_w, conv_b)
    assert out.shape == (N, Cout, H // 2, W // 2), out.shape
    # bf16 activations/weights/stats and bf16 kernel writeback vs an exact f32
    # reference -> bf16-appropriate tolerance.
    np.testing.assert_allclose(np.asarray(out), np.asarray(ref), rtol=5e-2, atol=5e-2)

    # --- Test 2: lane-aligned channels (C % 128 == 0) -> exercises the packed
    #     (Mq, 4C) fast path that real DenseNet transitions (C=256/512/1024) use.
    kk = jax.random.split(jax.random.PRNGKey(1), 5)
    N2, C2, H2, W2 = 2, 128, 8, 8
    Cout2 = int(C2 * compression_factor)
    x2 = jax.random.normal(kk[0], (N2, C2, H2, W2), dtype=jnp.float32)
    gamma2 = 1.0 + 0.1 * jax.random.normal(kk[1], (C2,), dtype=jnp.float32)
    beta2 = 0.1 * jax.random.normal(kk[2], (C2,), dtype=jnp.float32)
    conv_w2 = jax.random.normal(kk[3], (Cout2, C2, 1, 1), dtype=jnp.float32) / np.sqrt(C2)
    conv_b2 = 0.1 * jax.random.normal(kk[4], (Cout2,), dtype=jnp.float32)

    out2 = jax.block_until_ready(
        transition_block_pallas(x2, gamma2, beta2, conv_w2, conv_b2))
    ref2 = transition_block_ref(x2, gamma2, beta2, conv_w2, conv_b2)
    assert out2.shape == (N2, Cout2, H2 // 2, W2 // 2), out2.shape
    np.testing.assert_allclose(np.asarray(out2), np.asarray(ref2), rtol=5e-2, atol=5e-2)

    print("KERNEL_OK")
</pallas_src>

<mosaic_0001>
module attributes {stable_mosaic.version = 11 : i64} {
  func.func @kernel(%arg0: i32, %arg1: memref<4x64x4xbf16, #tpu.memory_space<vmem>>, %arg2: memref<1x4xbf16, #tpu.memory_space<vmem>>, %arg3: memref<1x4xbf16, #tpu.memory_space<vmem>>, %arg4: memref<4x128xbf16, #tpu.memory_space<vmem>>, %arg5: memref<1x128xf32, #tpu.memory_space<vmem>>, %arg6: memref<64x128xbf16, #tpu.memory_space<vmem>>) attributes {dimension_semantics = [#tpu.dimension_semantics<parallel>], iteration_bounds = array<i64: 2>, scalar_prefetch = 0 : i64, scratch_operands = 0 : i64, tpu.core_type = #tpu.core_type<tc>, window_params = [{transform_indices = @transform_0, window_bounds = array<i64: 4, 64, 4>}, {pipeline_mode = #tpu.pipeline_mode<synchronous>, transform_indices = @transform_1, window_bounds = array<i64: 1, 4>}, {pipeline_mode = #tpu.pipeline_mode<synchronous>, transform_indices = @transform_2, window_bounds = array<i64: 1, 4>}, {pipeline_mode = #tpu.pipeline_mode<synchronous>, transform_indices = @transform_3, window_bounds = array<i64: 4, 128>}, {pipeline_mode = #tpu.pipeline_mode<synchronous>, transform_indices = @transform_4, window_bounds = array<i64: 1, 128>}, {transform_indices = @transform_5, window_bounds = array<i64: 64, 128>}]} {
    %c0 = arith.constant 0 : index
    %c0_0 = arith.constant 0 : index
    %0 = vector.load %arg2[%c0, %c0_0] : memref<1x4xbf16, #tpu.memory_space<vmem>>, vector<1x4xbf16>
    %1 = vector.shape_cast %0 : vector<1x4xbf16> to vector<1x4xbf16>
    %2 = vector.broadcast %1 : vector<1x4xbf16> to vector<64x4xbf16>
    %c0_1 = arith.constant 0 : index
    %c0_2 = arith.constant 0 : index
    %3 = vector.load %arg3[%c0_1, %c0_2] : memref<1x4xbf16, #tpu.memory_space<vmem>>, vector<1x4xbf16>
    %4 = vector.shape_cast %3 : vector<1x4xbf16> to vector<1x4xbf16>
    %5 = vector.broadcast %4 : vector<1x4xbf16> to vector<64x4xbf16>
    %c0_3 = arith.constant 0 : index
    %c0_4 = arith.constant 0 : index
    %c0_5 = arith.constant 0 : index
    %6 = vector.load %arg1[%c0_3, %c0_4, %c0_5] : memref<4x64x4xbf16, #tpu.memory_space<vmem>>, vector<1x64x4xbf16>
    %7 = vector.shape_cast %6 : vector<1x64x4xbf16> to vector<64x4xbf16>
    %8 = arith.mulf %7, %2 : vector<64x4xbf16>
    %9 = arith.addf %8, %5 : vector<64x4xbf16>
    %cst = arith.constant 0.000000e+00 : bf16
    %10 = vector.broadcast %cst : bf16 to vector<64x4xbf16>
    %11 = arith.maximumf %9, %10 : vector<64x4xbf16>
    %c1 = arith.constant 1 : index
    %c0_6 = arith.constant 0 : index
    %c0_7 = arith.constant 0 : index
    %12 = vector.load %arg1[%c1, %c0_6, %c0_7] : memref<4x64x4xbf16, #tpu.memory_space<vmem>>, vector<1x64x4xbf16>
    %13 = vector.shape_cast %12 : vector<1x64x4xbf16> to vector<64x4xbf16>
    %14 = arith.mulf %13, %2 : vector<64x4xbf16>
    %15 = arith.addf %14, %5 : vector<64x4xbf16>
    %cst_8 = arith.constant 0.000000e+00 : bf16
    %16 = vector.broadcast %cst_8 : bf16 to vector<64x4xbf16>
    %17 = arith.maximumf %15, %16 : vector<64x4xbf16>
    %18 = arith.addf %11, %17 : vector<64x4xbf16>
    %c2 = arith.constant 2 : index
    %c0_9 = arith.constant 0 : index
    %c0_10 = arith.constant 0 : index
    %19 = vector.load %arg1[%c2, %c0_9, %c0_10] : memref<4x64x4xbf16, #tpu.memory_space<vmem>>, vector<1x64x4xbf16>
    %20 = vector.shape_cast %19 : vector<1x64x4xbf16> to vector<64x4xbf16>
    %21 = arith.mulf %20, %2 : vector<64x4xbf16>
    %22 = arith.addf %21, %5 : vector<64x4xbf16>
    %cst_11 = arith.constant 0.000000e+00 : bf16
    %23 = vector.broadcast %cst_11 : bf16 to vector<64x4xbf16>
    %24 = arith.maximumf %22, %23 : vector<64x4xbf16>
    %25 = arith.addf %18, %24 : vector<64x4xbf16>
    %c3 = arith.constant 3 : index
    %c0_12 = arith.constant 0 : index
    %c0_13 = arith.constant 0 : index
    %26 = vector.load %arg1[%c3, %c0_12, %c0_13] : memref<4x64x4xbf16, #tpu.memory_space<vmem>>, vector<1x64x4xbf16>
    %27 = vector.shape_cast %26 : vector<1x64x4xbf16> to vector<64x4xbf16>
    %28 = arith.mulf %27, %2 : vector<64x4xbf16>
    %29 = arith.addf %28, %5 : vector<64x4xbf16>
    %cst_14 = arith.constant 0.000000e+00 : bf16
    %30 = vector.broadcast %cst_14 : bf16 to vector<64x4xbf16>
    %31 = arith.maximumf %29, %30 : vector<64x4xbf16>
    %32 = arith.addf %25, %31 : vector<64x4xbf16>
    %c0_15 = arith.constant 0 : index
    %c0_16 = arith.constant 0 : index
    %33 = vector.load %arg4[%c0_15, %c0_16] : memref<4x128xbf16, #tpu.memory_space<vmem>>, vector<4x128xbf16>
    %cst_17 = arith.constant dense<0.000000e+00> : vector<64x128xf32>
    %34 = tpu.matmul %32, %33, %cst_17 {dimension_numbers = #tpu.dot_dimension_numbers<[1], [0], [0], [1], [0, 0, 1, 1], [], []>} : vector<64x4xbf16>, vector<4x128xbf16>, vector<64x128xf32> -> vector<64x128xf32>
    %c0_18 = arith.constant 0 : index
    %c0_19 = arith.constant 0 : index
    %35 = vector.load %arg5[%c0_18, %c0_19] : memref<1x128xf32, #tpu.memory_space<vmem>>, vector<1x128xf32>
    %36 = vector.broadcast %35 : vector<1x128xf32> to vector<64x128xf32>
    %37 = arith.addf %34, %36 : vector<64x128xf32>
    %38 = arith.truncf %37 : vector<64x128xf32> to vector<64x128xbf16>
    %c0_20 = arith.constant 0 : index
    %c0_21 = arith.constant 0 : index
    %39 = vector.load %arg6[%c0_20, %c0_21] : memref<64x128xbf16, #tpu.memory_space<vmem>>, vector<64x128xbf16>
    tpu.vector_store %arg6[%c0_20, %c0_21], %38 {strides = array<i32>} : memref<64x128xbf16, #tpu.memory_space<vmem>>, vector<64x128xbf16>,
    return
  }
  func.func @transform_0(%arg0: i32) -> (i32, i32, i32) {
    %c0_i32 = arith.constant 0 : i32
    %c0_i32_0 = arith.constant 0 : i32
    %c0_i32_1 = arith.constant 0 : i32
    return %c0_i32, %arg0, %c0_i32_0 : i32, i32, i32
  }
  func.func @transform_1(%arg0: i32) -> (i32, i32) {
    %c0_i32 = arith.constant 0 : i32
    %c0_i32_0 = arith.constant 0 : i32
    %c0_i32_1 = arith.constant 0 : i32
    return %c0_i32, %c0_i32_0 : i32, i32
  }
  func.func @transform_2(%arg0: i32) -> (i32, i32) {
    %c0_i32 = arith.constant 0 : i32
    %c0_i32_0 = arith.constant 0 : i32
    %c0_i32_1 = arith.constant 0 : i32
    return %c0_i32, %c0_i32_0 : i32, i32
  }
  func.func @transform_3(%arg0: i32) -> (i32, i32) {
    %c0_i32 = arith.constant 0 : i32
    %c0_i32_0 = arith.constant 0 : i32
    %c0_i32_1 = arith.constant 0 : i32
    return %c0_i32, %c0_i32_0 : i32, i32
  }
  func.func @transform_4(%arg0: i32) -> (i32, i32) {
    %c0_i32 = arith.constant 0 : i32
    %c0_i32_0 = arith.constant 0 : i32
    %c0_i32_1 = arith.constant 0 : i32
    return %c0_i32, %c0_i32_0 : i32, i32
  }
  func.func @transform_5(%arg0: i32) -> (i32, i32) {
    %c0_i32 = arith.constant 0 : i32
    %c0_i32_0 = arith.constant 0 : i32
    return %arg0, %c0_i32 : i32, i32
  }
}

</mosaic_0001>

<llo_original>
// kernel: transition_block_pallas.1
$region0: #{transition_block_pallas.1}
  #allocation0 [shape = 'u32[]', space=smem, size = 0x4, offset = 0x4, fixed_abs, tag = 'smem constant byte address 0x4 - core index']
  #allocation1 [shape = 'u32[144,128]{1,0:T(1,128)}', space=vmem, size = 0x12000, scoped, tag = 'internal scratch']
  %s0 = inlined_call_operand.vmem [shape: bf16[4,128,4], index: 0, kind: input, shape index: {}]
  %s1 = inlined_call_operand.vmem [shape: bf16[1,4], index: 1, kind: input, shape index: {}]
  %s2 = inlined_call_operand.vmem [shape: bf16[1,4], index: 2, kind: input, shape index: {}]
  %s3 = inlined_call_operand.vmem [shape: bf16[4,128], index: 3, kind: input, shape index: {}]
  %s4 = inlined_call_operand.vmem [shape: f32[1,128], index: 4, kind: input, shape index: {}]
  %s5 = inlined_call_operand.vmem [shape: bf16[128,128], index: 5, kind: output, shape index: {}]
  %s6 = sld [smem:[#allocation0]]
  $region94: #{transition_block_pallas.1} parent=0
    _
  %s8 = ssub.s32 1, %s6
  %s9 = scalar_select 0, %s8, %s6
  $region1: #{transition_block_pallas.1} parent=0
    #allocation2 [shape = 'u8[131072]{0}', space=vmem, size = 0x20000, scoped, tag = 'input window, operand 0']
    loop: start=0, step=1, limit=4
    $region2: #{transition_block_pallas.1} parent=1 // loop_pre_header
      _
    $region3: #{transition_block_pallas.1} parent=1 // loop_header
      %s11 = sphi 0, %s15
      %p12 = scmp.ge.s32.totalorder %s11, 4
      %s21 = sphi 0, %s23
      %s24 = sphi 0, %s21
      %s25 = sphi 0, %s24
      %s41 = sphi 0, %s25
      %s45 = sphi 0, %s45
      %s47 = sphi 0, %s45
      %s48 = sphi 0, %s47
      %s62 = sphi 0, %s48
      %s66 = sphi 0, %s66
      %s68 = sphi 0, %s66
      %s69 = sphi 0, %s68
      %s83 = sphi 0, %s69
      %s87 = sphi 0, %s87
      %s89 = sphi 0, %s87
      %s90 = sphi 0, %s89
      %s104 = sphi 0, %s90
      %s108 = sphi 0, %s108
      %s110 = sphi 0, %s108
      %s111 = sphi 0, %s110
      %s125 = sphi 0, %s111
      %s131 = sphi 0, %s133
      %s134 = sphi 0, %s131
      %s135 = sphi 0, %s134
      %s151 = sphi 0, %s135
    $region4: #{transition_block_pallas.1} parent=1 // loop_header_branch
      %14 = sbr.rel (%p12) target = $region8
    $region5: #{transition_block_pallas.1} parent=1 // loop_body
      %s16 = ssub.s32 %s11, 1
      %s17 = ssub.s32 %s11, 2
      %s18 = sadd.s32 %s11, 1
      %s19 = ssub.s32 %s11, %s18
      %p20 = scmp.eq.s32.totalorder %s19, 0
      %s22 = sadd.s32 %s21, 1
      %s23 = scalar_select %p20, %s21, %s22
      %p26 = pneg %p20
      %p27 = scmp.eq.s32.totalorder %s11, 1
      %p28 = por %p26, %p27
      %p29 = scmp.ne.s32.totalorder %s21, %s24
      %p30 = scmp.eq.s32.totalorder %s11, 0
      %p31 = por %p29, %p30
      %p32 = scmp.ne.s32.totalorder %s21, %s24
      %p33 = scmp.eq.s32.totalorder %s16, 1
      %p34 = por %p32, %p33
      %p35 = scmp.ne.s32.totalorder %s24, %s25
      %p36 = scmp.eq.s32.totalorder %s16, 0
      %p37 = por %p35, %p36
      %p38 = scmp.ne.s32.totalorder %s24, %s25
      %p39 = scmp.eq.s32.totalorder %s17, 1
      %p40 = por %p38, %p39
      %p42 = scmp.ne.s32.totalorder %s25, %s41
      %p43 = scmp.eq.s32.totalorder %s17, 0
      %p44 = por %p42, %p43
      %s46 = sadd.s32 %s45, 1
      %p49 = scmp.eq.s32.totalorder %s11, 1
      %p50 = scmp.ne.s32.totalorder %s45, %s47
      %p51 = scmp.eq.s32.totalorder %s11, 0
      %p52 = por %p50, %p51
      %p53 = scmp.ne.s32.totalorder %s45, %s47
      %p54 = scmp.eq.s32.totalorder %s16, 1
      %p55 = por %p53, %p54
      %p56 = scmp.ne.s32.totalorder %s47, %s48
      %p57 = scmp.eq.s32.totalorder %s16, 0
      %p58 = por %p56, %p57
      %p59 = scmp.ne.s32.totalorder %s47, %s48
      %p60 = scmp.eq.s32.totalorder %s17, 1
      %p61 = por %p59, %p60
      %p63 = scmp.ne.s32.totalorder %s48, %s62
      %p64 = scmp.eq.s32.totalorder %s17, 0
      %p65 = por %p63, %p64
      %s67 = sadd.s32 %s66, 1
      %p70 = scmp.eq.s32.totalorder %s11, 1
      %p71 = scmp.ne.s32.totalorder %s66, %s68
      %p72 = scmp.eq.s32.totalorder %s11, 0
      %p73 = por %p71, %p72
      %p74 = scmp.ne.s32.totalorder %s66, %s68
      %p75 = scmp.eq.s32.totalorder %s16, 1
      %p76 = por %p74, %p75
      %p77 = scmp.ne.s32.totalorder %s68, %s69
      %p78 = scmp.eq.s32.totalorder %s16, 0
      %p79 = por %p77, %p78
      %p80 = scmp.ne.s32.totalorder %s68, %s69
      %p81 = scmp.eq.s32.totalorder %s17, 1
      %p82 = por %p80, %p81
      %p84 = scmp.ne.s32.totalorder %s69, %s83
      %p85 = scmp.eq.s32.totalorder %s17, 0
      %p86 = por %p84, %p85
      %s88 = sadd.s32 %s87, 1
      %p91 = scmp.eq.s32.totalorder %s11, 1
      %p92 = scmp.ne.s32.totalorder %s87, %s89
      %p93 = scmp.eq.s32.totalorder %s11, 0
      %p94 = por %p92, %p93
      %p95 = scmp.ne.s32.totalorder %s87, %s89
      %p96 = scmp.eq.s32.totalorder %s16, 1
      %p97 = por %p95, %p96
      %p98 = scmp.ne.s32.totalorder %s89, %s90
      %p99 = scmp.eq.s32.totalorder %s16, 0
      %p100 = por %p98, %p99
      %p101 = scmp.ne.s32.totalorder %s89, %s90
      %p102 = scmp.eq.s32.totalorder %s17, 1
      %p103 = por %p101, %p102
      %p105 = scmp.ne.s32.totalorder %s90, %s104
      %p106 = scmp.eq.s32.totalorder %s17, 0
      %p107 = por %p105, %p106
      %s109 = sadd.s32 %s108, 1
      %p112 = scmp.eq.s32.totalorder %s11, 1
      %p113 = scmp.ne.s32.totalorder %s108, %s110
      %p114 = scmp.eq.s32.totalorder %s11, 0
      %p115 = por %p113, %p114
      %p116 = scmp.ne.s32.totalorder %s108, %s110
      %p117 = scmp.eq.s32.totalorder %s16, 1
      %p118 = por %p116, %p117
      %p119 = scmp.ne.s32.totalorder %s110, %s111
      %p120 = scmp.eq.s32.totalorder %s16, 0
      %p121 = por %p119, %p120
      %p122 = scmp.ne.s32.totalorder %s110, %s111
      %p123 = scmp.eq.s32.totalorder %s17, 1
      %p124 = por %p122, %p123
      %p126 = scmp.ne.s32.totalorder %s111, %s125
      %p127 = scmp.eq.s32.totalorder %s17, 0
      %p128 = por %p126, %p127
      %s129 = ssub.s32 %s11, %s18
      %p130 = scmp.eq.s32.totalorder %s129, 0
      %s132 = sadd.s32 %s131, 1
      %s133 = scalar_select %p130, %s131, %s132
      %p136 = pneg %p130
      %p137 = scmp.eq.s32.totalorder %s11, 1
      %p138 = por %p136, %p137
      %p139 = scmp.ne.s32.totalorder %s131, %s134
      %p140 = scmp.eq.s32.totalorder %s11, 0
      %p141 = por %p139, %p140
      %p142 = scmp.ne.s32.totalorder %s131, %s134
      %p143 = scmp.eq.s32.totalorder %s16, 1
      %p144 = por %p142, %p143
      %p145 = scmp.ne.s32.totalorder %s134, %s135
      %p146 = scmp.eq.s32.totalorder %s16, 0
      %p147 = por %p145, %p146
      %p148 = scmp.ne.s32.totalorder %s134, %s135
      %p149 = scmp.eq.s32.totalorder %s17, 1
      %p150 = por %p148, %p149
      %p152 = scmp.ne.s32.totalorder %s135, %s151
      %p153 = scmp.eq.s32.totalorder %s17, 0
      %p154 = por %p152, %p153
      %p155 = scmp.le.s32.totalorder 1, %s11
      %p156 = scmp.lt.s32.totalorder %s11, 3
      %p157 = pnand %p155, %p156
      %p158 = pneg %p157
      // Predicated region
      $region9: #{transition_block_pallas.1} parent=5 // pred_check
        _
      $region10: #{transition_block_pallas.1} parent=5 // pred_check_branch
        %160 = sbr.rel (%p157) target = $region12
      $region11: #{transition_block_pallas.1} parent=5 // pred_region
        %s161 = ssub.s32 %s11, 1
        // Predicated region
        $region13: #{transition_block_pallas.1} parent=11 // pred_check
          %p162 = pneg %p58
        $region14: #{transition_block_pallas.1} parent=11 // pred_check_branch
          %164 = sbr.rel (%p162) target = $region16
        $region15: #{transition_block_pallas.1} parent=11 // pred_region
          _
        $region16: #{transition_block_pallas.1} parent=11 // pred_fallthru
          _
        // Predicated region
        $region17: #{transition_block_pallas.1} parent=11 // pred_check
          %p165 = pneg %p79
        $region18: #{transition_block_pallas.1} parent=11 // pred_check_branch
          %167 = sbr.rel (%p165) target = $region20
        $region19: #{transition_block_pallas.1} parent=11 // pred_region
          _
        $region20: #{transition_block_pallas.1} parent=11 // pred_fallthru
          _
        // Predicated region
        $region21: #{transition_block_pallas.1} parent=11 // pred_check
          %p168 = pneg %p100
        $region22: #{transition_block_pallas.1} parent=11 // pred_check_branch
          %170 = sbr.rel (%p168) target = $region24
        $region23: #{transition_block_pallas.1} parent=11 // pred_region
          _
        $region24: #{transition_block_pallas.1} parent=11 // pred_fallthru
          _
        // Predicated region
        $region25: #{transition_block_pallas.1} parent=11 // pred_check
          %p171 = pneg %p121
        $region26: #{transition_block_pallas.1} parent=11 // pred_check_branch
          %173 = sbr.rel (%p171) target = $region28
        $region27: #{transition_block_pallas.1} parent=11 // pred_region
          _
        $region28: #{transition_block_pallas.1} parent=11 // pred_fallthru
          _
      $region12: #{transition_block_pallas.1} parent=5 // pred_fallthru
        _
      %p174 = scmp.lt.s32.totalorder %s11, 2
      // Predicated region
      $region29: #{transition_block_pallas.1} parent=5 // pred_check
        %p175 = pneg %p174
      $region30: #{transition_block_pallas.1} parent=5 // pred_check_branch
        %177 = sbr.rel (%p175) target = $region32
      $region31: #{transition_block_pallas.1} parent=5 // pred_region
        // Predicated region
        $region33: #{transition_block_pallas.1} parent=31 // pred_check
          %p178 = pneg %p31
        $region34: #{transition_block_pallas.1} parent=31 // pred_check_branch
          %180 = sbr.rel (%p178) target = $region36
        $region35: #{transition_block_pallas.1} parent=31 // pred_region
          %s181 = sand.u32 %s21, 1
          %s182 = sand.u32 %s21, 1
          %s183 = smul.addr %s182, 128
          %s184 = scalar_lea.vmem [#allocation2], %s183
          %s185 = smul.u32 8, %s11
          %s186 = smul.addr %s185, 4
          %s187 = scalar_lea.vmem %s0, %s186
          // Predicated region
          $region37: #{transition_block_pallas.1} parent=35 // pred_check
            _
          $region38: #{transition_block_pallas.1} parent=35 // pred_check_branch
            %189 = sbr.rel (0) target = $region40
          $region39: #{transition_block_pallas.1} parent=35 // pred_region
            // Predicated region
            $region41: #{transition_block_pallas.1} parent=39 // pred_check
              _
            $region42: #{transition_block_pallas.1} parent=39 // pred_check_branch
              %191 = sbr.rel target = $region44
            $region43: #{transition_block_pallas.1} parent=39 // pred_region
              // Predicated region
              $region56: #{transition_block_pallas.1} parent=43 // pred_check
                _
              $region57: #{transition_block_pallas.1} parent=43 // pred_check_branch
                %268 = sbr.rel (0) target = $region59
              $region58: #{transition_block_pallas.1} parent=43 // pred_region
                loop: start=0, step=1, limit=1
                $region60: #{transition_block_pallas.1} parent=58 // loop_pre_header
                  _
                $region61: #{transition_block_pallas.1} parent=58 // loop_header
                  %s270 = sphi 0, %s274
                  %p271 = scmp.ge.s32.totalorder %s270, 1
                  %s275 = sphi %s187, %s187
                  %s276 = sphi %s184, %s184
                $region62: #{transition_block_pallas.1} parent=58 // loop_header_branch
                  %273 = sbr.rel (%p271) target = $region66
                $region63: #{transition_block_pallas.1} parent=58 // loop_body
                  _
                $region64: #{transition_block_pallas.1} parent=58 // loop_footer
                  %s274 = sadd.s32 1, %s270
                $region65: #{transition_block_pallas.1} parent=58 // loop_footer_branch
                  %269 = sbr.rel target = $region61
                $region66: #{transition_block_pallas.1} parent=58 // loop_exit
                  _
                loop: start=0, step=1, limit=1
                $region67: #{transition_block_pallas.1} parent=58 // loop_pre_header
                  _
                $region68: #{transition_block_pallas.1} parent=58 // loop_header
                  %s279 = sphi 0, %s283
                  %p280 = scmp.ge.s32.totalorder %s279, 1
                  %s284 = sphi %s187, %s187
                  %s285 = sphi %s184, %s184
                $region69: #{transition_block_pallas.1} parent=58 // loop_header_branch
                  %282 = sbr.rel (%p280) target = $region73
                $region70: #{transition_block_pallas.1} parent=58 // loop_body
                  %v286 = vld [vmem:[%s284] sm:$0xf]
                  %287 = vst [vmem:[%s285] sm:$0xf] %v286
                  %v288 = vld [vmem:[%s284 + $0x4] sm:$0xf]
                  %289 = vst [vmem:[%s285 + $0x4] sm:$0xf] %v288
                  %v290 = vld [vmem:[%s284 + $0x8] sm:$0xf]
                  %291 = vst [vmem:[%s285 + $0x8] sm:$0xf] %v290
                  %v292 = vld [vmem:[%s284 + $0xc] sm:$0xf]
                  %293 = vst [vmem:[%s285 + $0xc] sm:$0xf] %v292
                  %v294 = vld [vmem:[%s284 + $0x10] sm:$0xf]
                  %295 = vst [vmem:[%s285 + $0x10] sm:$0xf] %v294
                  %v296 = vld [vmem:[%s284 + $0x14] sm:$0xf]
                  %297 = vst [vmem:[%s285 + $0x14] sm:$0xf] %v296
                  %v298 = vld [vmem:[%s284 + $0x18] sm:$0xf]
                  %299 = vst [vmem:[%s285 + $0x18] sm:$0xf] %v298
                  %v300 = vld [vmem:[%s284 + $0x1c] sm:$0xf]
                  %301 = vst [vmem:[%s285 + $0x1c] sm:$0xf] %v300
                  %v302 = vld [vmem:[%s284 + $0x40] sm:$0xf]
                  %303 = vst [vmem:[%s285 + $0x20] sm:$0xf] %v302
                  %v304 = vld [vmem:[%s284 + $0x44] sm:$0xf]
                  %305 = vst [vmem:[%s285 + $0x24] sm:$0xf] %v304
                  %v306 = vld [vmem:[%s284 + $0x48] sm:$0xf]
                  %307 = vst [vmem:[%s285 + $0x28] sm:$0xf] %v306
                  %v308 = vld [vmem:[%s284 + $0x4c] sm:$0xf]
                  %309 = vst [vmem:[%s285 + $0x2c] sm:$0xf] %v308
                  %v310 = vld [vmem:[%s284 + $0x50] sm:$0xf]
                  %311 = vst [vmem:[%s285 + $0x30] sm:$0xf] %v310
                  %v312 = vld [vmem:[%s284 + $0x54] sm:$0xf]
                  %313 = vst [vmem:[%s285 + $0x34] sm:$0xf] %v312
                  %v314 = vld [vmem:[%s284 + $0x58] sm:$0xf]
                  %315 = vst [vmem:[%s285 + $0x38] sm:$0xf] %v314
                  %v316 = vld [vmem:[%s284 + $0x5c] sm:$0xf]
                  %317 = vst [vmem:[%s285 + $0x3c] sm:$0xf] %v316
                  %v318 = vld [vmem:[%s284 + $0x80] sm:$0xf]
                  %319 = vst [vmem:[%s285 + $0x40] sm:$0xf] %v318
                  %v320 = vld [vmem:[%s284 + $0x84] sm:$0xf]
                  %321 = vst [vmem:[%s285 + $0x44] sm:$0xf] %v320
                  %v322 = vld [vmem:[%s284 + $0x88] sm:$0xf]
                  %323 = vst [vmem:[%s285 + $0x48] sm:$0xf] %v322
                  %v324 = vld [vmem:[%s284 + $0x8c] sm:$0xf]
                  %325 = vst [vmem:[%s285 + $0x4c] sm:$0xf] %v324
                  %v326 = vld [vmem:[%s284 + $0x90] sm:$0xf]
                  %327 = vst [vmem:[%s285 + $0x50] sm:$0xf] %v326
                  %v328 = vld [vmem:[%s284 + $0x94] sm:$0xf]
                  %329 = vst [vmem:[%s285 + $0x54] sm:$0xf] %v328
                  %v330 = vld [vmem:[%s284 + $0x98] sm:$0xf]
                  %331 = vst [vmem:[%s285 + $0x58] sm:$0xf] %v330
                  %v332 = vld [vmem:[%s284 + $0x9c] sm:$0xf]
                  %333 = vst [vmem:[%s285 + $0x5c] sm:$0xf] %v332
                  %v334 = vld [vmem:[%s284 + $0xc0] sm:$0xf]
                  %335 = vst [vmem:[%s285 + $0x60] sm:$0xf] %v334
                  %v336 = vld [vmem:[%s284 + $0xc4] sm:$0xf]
                  %337 = vst [vmem:[%s285 + $0x64] sm:$0xf] %v336
                  %v338 = vld [vmem:[%s284 + $0xc8] sm:$0xf]
                  %339 = vst [vmem:[%s285 + $0x68] sm:$0xf] %v338
                  %v340 = vld [vmem:[%s284 + $0xcc] sm:$0xf]
                  %341 = vst [vmem:[%s285 + $0x6c] sm:$0xf] %v340
                  %v342 = vld [vmem:[%s284 + $0xd0] sm:$0xf]
                  %343 = vst [vmem:[%s285 + $0x70] sm:$0xf] %v342
                  %v344 = vld [vmem:[%s284 + $0xd4] sm:$0xf]
                  %345 = vst [vmem:[%s285 + $0x74] sm:$0xf] %v344
                  %v346 = vld [vmem:[%s284 + $0xd8] sm:$0xf]
                  %347 = vst [vmem:[%s285 + $0x78] sm:$0xf] %v346
                  %v348 = vld [vmem:[%s284 + $0xdc] sm:$0xf]
                  %349 = vst [vmem:[%s285 + $0x7c] sm:$0xf] %v348
                $region71: #{transition_block_pallas.1} parent=58 // loop_footer
                  %s283 = sadd.s32 1, %s279
                $region72: #{transition_block_pallas.1} parent=58 // loop_footer_branch
                  %278 = sbr.rel target = $region68
                $region73: #{transition_block_pallas.1} parent=58 // loop_exit
                  _
              $region59: #{transition_block_pallas.1} parent=43 // pred_fallthru
                _
            $region44: #{transition_block_pallas.1} parent=39 // pred_fallthru
              _
            // Predicated region
            $region45: #{transition_block_pallas.1} parent=39 // pred_check
              _
            $region46: #{transition_block_pallas.1} parent=39 // pred_check_branch
              %193 = sbr.rel (0) target = $region48
            $region47: #{transition_block_pallas.1} parent=39 // pred_region
              loop: start=0, step=1, limit=1
              $region49: #{transition_block_pallas.1} parent=47 // loop_pre_header
                _
              $region50: #{transition_block_pallas.1} parent=47 // loop_header
                %s196 = sphi 0, %s200
                %p197 = scmp.ge.s32.totalorder %s196, 1
                %s201 = sphi %s187, %s187
                %s202 = sphi %s184, %s184
              $region51: #{transition_block_pallas.1} parent=47 // loop_header_branch
                %199 = sbr.rel (%p197) target = $region55
              $region52: #{transition_block_pallas.1} parent=47 // loop_body
                %v203 = vld [vmem:[%s201] sm:$0xf]
                %204 = vst [vmem:[%s202] sm:$0xf] %v203
                %v205 = vld [vmem:[%s201 + $0x4] sm:$0xf]
                %206 = vst [vmem:[%s202 + $0x4] sm:$0xf] %v205
                %v207 = vld [vmem:[%s201 + $0x8] sm:$0xf]
                %208 = vst [vmem:[%s202 + $0x8] sm:$0xf] %v207
                %v209 = vld [vmem:[%s201 + $0xc] sm:$0xf]
                %210 = vst [vmem:[%s202 + $0xc] sm:$0xf] %v209
                %v211 = vld [vmem:[%s201 + $0x10] sm:$0xf]
                %212 = vst [vmem:[%s202 + $0x10] sm:$0xf] %v211
                %v213 = vld [vmem:[%s201 + $0x14] sm:$0xf]
                %214 = vst [vmem:[%s202 + $0x14] sm:$0xf] %v213
                %v215 = vld [vmem:[%s201 + $0x18] sm:$0xf]
                %216 = vst [vmem:[%s202 + $0x18] sm:$0xf] %v215
                %v217 = vld [vmem:[%s201 + $0x1c] sm:$0xf]
                %218 = vst [vmem:[%s202 + $0x1c] sm:$0xf] %v217
                %v219 = vld [vmem:[%s201 + $0x40] sm:$0xf]
                %220 = vst [vmem:[%s202 + $0x20] sm:$0xf] %v219
                %v221 = vld [vmem:[%s201 + $0x44] sm:$0xf]
                %222 = vst [vmem:[%s202 + $0x24] sm:$0xf] %v221
                %v223 = vld [vmem:[%s201 + $0x48] sm:$0xf]
                %224 = vst [vmem:[%s202 + $0x28] sm:$0xf] %v223
                %v225 = vld [vmem:[%s201 + $0x4c] sm:$0xf]
                %226 = vst [vmem:[%s202 + $0x2c] sm:$0xf] %v225
                %v227 = vld [vmem:[%s201 + $0x50] sm:$0xf]
                %228 = vst [vmem:[%s202 + $0x30] sm:$0xf] %v227
                %v229 = vld [vmem:[%s201 + $0x54] sm:$0xf]
                %230 = vst [vmem:[%s202 + $0x34] sm:$0xf] %v229
                %v231 = vld [vmem:[%s201 + $0x58] sm:$0xf]
                %232 = vst [vmem:[%s202 + $0x38] sm:$0xf] %v231
                %v233 = vld [vmem:[%s201 + $0x5c] sm:$0xf]
                %234 = vst [vmem:[%s202 + $0x3c] sm:$0xf] %v233
                %v235 = vld [vmem:[%s201 + $0x80] sm:$0xf]
                %236 = vst [vmem:[%s202 + $0x40] sm:$0xf] %v235
                %v237 = vld [vmem:[%s201 + $0x84] sm:$0xf]
                %238 = vst [vmem:[%s202 + $0x44] sm:$0xf] %v237
                %v239 = vld [vmem:[%s201 + $0x88] sm:$0xf]
                %240 = vst [vmem:[%s202 + $0x48] sm:$0xf] %v239
                %v241 = vld [vmem:[%s201 + $0x8c] sm:$0xf]
                %242 = vst [vmem:[%s202 + $0x4c] sm:$0xf] %v241
                %v243 = vld [vmem:[%s201 + $0x90] sm:$0xf]
                %244 = vst [vmem:[%s202 + $0x50] sm:$0xf] %v243
                %v245 = vld [vmem:[%s201 + $0x94] sm:$0xf]
                %246 = vst [vmem:[%s202 + $0x54] sm:$0xf] %v245
                %v247 = vld [vmem:[%s201 + $0x98] sm:$0xf]
                %248 = vst [vmem:[%s202 + $0x58] sm:$0xf] %v247
                %v249 = vld [vmem:[%s201 + $0x9c] sm:$0xf]
                %250 = vst [vmem:[%s202 + $0x5c] sm:$0xf] %v249
                %v251 = vld [vmem:[%s201 + $0xc0] sm:$0xf]
                %252 = vst [vmem:[%s202 + $0x60] sm:$0xf] %v251
                %v253 = vld [vmem:[%s201 + $0xc4] sm:$0xf]
                %254 = vst [vmem:[%s202 + $0x64] sm:$0xf] %v253
                %v255 = vld [vmem:[%s201 + $0xc8] sm:$0xf]
                %256 = vst [vmem:[%s202 + $0x68] sm:$0xf] %v255
                %v257 = vld [vmem:[%s201 + $0xcc] sm:$0xf]
                %258 = vst [vmem:[%s202 + $0x6c] sm:$0xf] %v257
                %v259 = vld [vmem:[%s201 + $0xd0] sm:$0xf]
                %260 = vst [vmem:[%s202 + $0x70] sm:$0xf] %v259
                %v261 = vld [vmem:[%s201 + $0xd4] sm:$0xf]
                %262 = vst [vmem:[%s202 + $0x74] sm:$0xf] %v261
                %v263 = vld [vmem:[%s201 + $0xd8] sm:$0xf]
                %264 = vst [vmem:[%s202 + $0x78] sm:$0xf] %v263
                %v265 = vld [vmem:[%s201 + $0xdc] sm:$0xf]
                %266 = vst [vmem:[%s202 + $0x7c] sm:$0xf] %v265
              $region53: #{transition_block_pallas.1} parent=47 // loop_footer
                %s200 = sadd.s32 1, %s196
              $region54: #{transition_block_pallas.1} parent=47 // loop_footer_branch
                %195 = sbr.rel target = $region50
              $region55: #{transition_block_pallas.1} parent=47 // loop_exit
                _
            $region48: #{transition_block_pallas.1} parent=39 // pred_fallthru
              _
          $region40: #{transition_block_pallas.1} parent=35 // pred_fallthru
            _
          %350 = vnop
        $region36: #{transition_block_pallas.1} parent=31 // pred_fallthru
          _
      $region32: #{transition_block_pallas.1} parent=5 // pred_fallthru
        _
      %p351 = scmp.le.s32.totalorder 1, %s11
      %p352 = scmp.lt.s32.totalorder %s11, 3
      %p353 = pnand %p351, %p352
      %p354 = pneg %p353
      // Predicated region
      $region74: #{transition_block_pallas.1} parent=5 // pred_check
        _
      $region75: #{transition_block_pallas.1} parent=5 // pred_check_branch
        %356 = sbr.rel (%p353) target = $region77
      $region76: #{transition_block_pallas.1} parent=5 // pred_region
        %s357 = ssub.s32 %s11, 1
        %s358 = sand.u32 %s24, 1
        %s359 = sand.u32 %s24, 1
        %s360 = smul.addr %s359, 128
        %s361 = scalar_lea.vmem [#allocation2], %s360
        // Predicated region
        $region78: #{transition_block_pallas.1} parent=76 // pred_check
          %p362 = pneg %p37
        $region79: #{transition_block_pallas.1} parent=76 // pred_check_branch
          %364 = sbr.rel (%p362) target = $region81
        $region80: #{transition_block_pallas.1} parent=76 // pred_region
          _
        $region81: #{transition_block_pallas.1} parent=76 // pred_fallthru
          _
        %s365 = sand.u32 %s24, 1
        %s366 = sand.u32 %s24, 1
        %s367 = smul.addr %s366, 128
        %s368 = scalar_lea.vmem [#allocation2], %s367
        %p369 = pneg %p37
        %p370 = pneg %p34
        %p371 = pneg %p58
        %p372 = pneg %p55
        %p373 = pneg %p79
        %p374 = pneg %p76
        %p375 = pneg %p100
        %p376 = pneg %p97
        %p377 = pneg %p121
        %p378 = pneg %p118
        %p379 = pneg %p147
        %p380 = pneg %p144
        %s381 = smul.u32 8, %s16
        %p382 = scmp.lt.s32.totalorder %s381, 15
        %s383 = scalar_select %p382, %s381, 15
        %s384 = smul.addr %s383, 4
        %s385 = scalar_lea.vmem %s5, %s384
        %s386 = smul.u32 8, %s16
        %s387 = smul.u32 8, %s16
        %p388 = scmp.lt.s32.totalorder %s387, 15
        %s389 = scalar_select %p388, %s387, 15
        %s390 = smul.addr %s389, 4
        %s391 = scalar_lea.vmem %s5, %s390
        %s392 = smul.u32 8, %s16
        %v394 = vld [vmem:[%s1] sm:$0x1]
        %v396 = vpack.i.b16 %v394, %v394
        %v398 = vlaneseq
        %v399 = vshrl.u32 %v398, 7
        %v400 = vsub.s32 0, %v399
        %v401 = vrot.slane %v396, %v400
        %v402 = vld [vmem:[%s2] sm:$0x1]
        %v404 = vpack.i.b16 %v402, %v402
        %v406 = vlaneseq
        %v407 = vshrl.u32 %v406, 7
        %v408 = vsub.s32 0, %v407
        %v409 = vrot.slane %v404, %v408
        %v410 = vld [vmem:[%s361] sm:$0xf]
        %v411 = vld [vmem:[%s361 + $0x4] sm:$0xf]
        %v412 = vld [vmem:[%s361 + $0x8] sm:$0xf]
        %v413 = vld [vmem:[%s361 + $0xc] sm:$0xf]
        %v414 = vld [vmem:[%s361 + $0x10] sm:$0xf]
        %v415 = vld [vmem:[%s361 + $0x14] sm:$0xf]
        %v416 = vld [vmem:[%s361 + $0x18] sm:$0xf]
        %v417 = vld [vmem:[%s361 + $0x1c] sm:$0xf]
        %v419 = vunpack.c.l.b16 %v401
        %v420 = vpack.c.b16 %v419, %v419
        %v422 = vmul.bf16 %v410, %v420
        %v423 = vmul.bf16 %v411, %v420
        %v424 = vmul.bf16 %v412, %v420
        %v425 = vmul.bf16 %v413, %v420
        %v426 = vmul.bf16 %v414, %v420
        %v427 = vmul.bf16 %v415, %v420
        %v428 = vmul.bf16 %v416, %v420
        %v429 = vmul.bf16 %v417, %v420
        %v431 = vunpack.c.l.b16 %v409
        %v432 = vpack.c.b16 %v431, %v431
        %v434 = vadd.bf16 %v422, %v432
        %v435 = vadd.bf16 %v423, %v432
        %v436 = vadd.bf16 %v424, %v432
        %v437 = vadd.bf16 %v425, %v432
        %v438 = vadd.bf16 %v426, %v432
        %v439 = vadd.bf16 %v427, %v432
        %v440 = vadd.bf16 %v428, %v432
        %v441 = vadd.bf16 %v429, %v432
        %v442 = vmax.bf16 %v434, 0
        %v443 = vmax.bf16 %v435, 0
        %v444 = vmax.bf16 %v436, 0
        %v445 = vmax.bf16 %v437, 0
        %v446 = vmax.bf16 %v438, 0
        %v447 = vmax.bf16 %v439, 0
        %v448 = vmax.bf16 %v440, 0
        %v449 = vmax.bf16 %v441, 0
        %s450 = scalar_lea.vmem %s361, 32 [#allocation2]
        %v451 = vld [vmem:[%s450] sm:$0xf]
        %v452 = vld [vmem:[%s450 + $0x4] sm:$0xf]
        %v453 = vld [vmem:[%s450 + $0x8] sm:$0xf]
        %v454 = vld [vmem:[%s450 + $0xc] sm:$0xf]
        %v455 = vld [vmem:[%s450 + $0x10] sm:$0xf]
        %v456 = vld [vmem:[%s450 + $0x14] sm:$0xf]
        %v457 = vld [vmem:[%s450 + $0x18] sm:$0xf]
        %v458 = vld [vmem:[%s450 + $0x1c] sm:$0xf]
        %v459 = vmul.bf16 %v451, %v420
        %v460 = vmul.bf16 %v452, %v420
        %v461 = vmul.bf16 %v453, %v420
        %v462 = vmul.bf16 %v454, %v420
        %v463 = vmul.bf16 %v455, %v420
        %v464 = vmul.bf16 %v456, %v420
        %v465 = vmul.bf16 %v457, %v420
        %v466 = vmul.bf16 %v458, %v420
        %v467 = vadd.bf16 %v459, %v432
        %v468 = vadd.bf16 %v460, %v432
        %v469 = vadd.bf16 %v461, %v432
        %v470 = vadd.bf16 %v462, %v432
        %v471 = vadd.bf16 %v463, %v432
        %v472 = vadd.bf16 %v464, %v432
        %v473 = vadd.bf16 %v465, %v432
        %v474 = vadd.bf16 %v466, %v432
        %v475 = vmax.bf16 %v467, 0
        %v476 = vmax.bf16 %v468, 0
        %v477 = vmax.bf16 %v469, 0
        %v478 = vmax.bf16 %v470, 0
        %v479 = vmax.bf16 %v471, 0
        %v480 = vmax.bf16 %v472, 0
        %v481 = vmax.bf16 %v473, 0
        %v482 = vmax.bf16 %v474, 0
        %v483 = vadd.bf16 %v442, %v475
        %v484 = vadd.bf16 %v443, %v476
        %v485 = vadd.bf16 %v444, %v477
        %v486 = vadd.bf16 %v445, %v478
        %v487 = vadd.bf16 %v446, %v479
        %v488 = vadd.bf16 %v447, %v480
        %v489 = vadd.bf16 %v448, %v481
        %v490 = vadd.bf16 %v449, %v482
        %s491 = scalar_lea.vmem %s361, 64 [#allocation2]
        %v492 = vld [vmem:[%s491] sm:$0xf]
        %v493 = vld [vmem:[%s491 + $0x4] sm:$0xf]
        %v494 = vld [vmem:[%s491 + $0x8] sm:$0xf]
        %v495 = vld [vmem:[%s491 + $0xc] sm:$0xf]
        %v496 = vld [vmem:[%s491 + $0x10] sm:$0xf]
        %v497 = vld [vmem:[%s491 + $0x14] sm:$0xf]
        %v498 = vld [vmem:[%s491 + $0x18] sm:$0xf]
        %v499 = vld [vmem:[%s491 + $0x1c] sm:$0xf]
        %v500 = vmul.bf16 %v492, %v420
        %v501 = vmul.bf16 %v493, %v420
        %v502 = vmul.bf16 %v494, %v420
        %v503 = vmul.bf16 %v495, %v420
        %v504 = vmul.bf16 %v496, %v420
        %v505 = vmul.bf16 %v497, %v420
        %v506 = vmul.bf16 %v498, %v420
        %v507 = vmul.bf16 %v499, %v420
        %v508 = vadd.bf16 %v500, %v432
        %v509 = vadd.bf16 %v501, %v432
        %v510 = vadd.bf16 %v502, %v432
        %v511 = vadd.bf16 %v503, %v432
        %v512 = vadd.bf16 %v504, %v432
        %v513 = vadd.bf16 %v505, %v432
        %v514 = vadd.bf16 %v506, %v432
        %v515 = vadd.bf16 %v507, %v432
        %v516 = vmax.bf16 %v508, 0
        %v517 = vmax.bf16 %v509, 0
        %v518 = vmax.bf16 %v510, 0
        %v519 = vmax.bf16 %v511, 0
        %v520 = vmax.bf16 %v512, 0
        %v521 = vmax.bf16 %v513, 0
        %v522 = vmax.bf16 %v514, 0
        %v523 = vmax.bf16 %v515, 0
        %v524 = vadd.bf16 %v483, %v516
        %v525 = vadd.bf16 %v484, %v517
        %v526 = vadd.bf16 %v485, %v518
        %v527 = vadd.bf16 %v486, %v519
        %v528 = vadd.bf16 %v487, %v520
        %v529 = vadd.bf16 %v488, %v521
        %v530 = vadd.bf16 %v489, %v522
        %v531 = vadd.bf16 %v490, %v523
        %s532 = scalar_lea.vmem %s361, 96 [#allocation2]
        %v533 = vld [vmem:[%s532] sm:$0xf]
        %v534 = vld [vmem:[%s532 + $0x4] sm:$0xf]
        %v535 = vld [vmem:[%s532 + $0x8] sm:$0xf]
        %v536 = vld [vmem:[%s532 + $0xc] sm:$0xf]
        %v537 = vld [vmem:[%s532 + $0x10] sm:$0xf]
        %v538 = vld [vmem:[%s532 + $0x14] sm:$0xf]
        %v539 = vld [vmem:[%s532 + $0x18] sm:$0xf]
        %v540 = vld [vmem:[%s532 + $0x1c] sm:$0xf]
        %v541 = vmul.bf16 %v533, %v420
        %v542 = vmul.bf16 %v534, %v420
        %v543 = vmul.bf16 %v535, %v420
        %v544 = vmul.bf16 %v536, %v420
        %v545 = vmul.bf16 %v537, %v420
        %v546 = vmul.bf16 %v538, %v420
        %v547 = vmul.bf16 %v539, %v420
        %v548 = vmul.bf16 %v540, %v420
        %v549 = vadd.bf16 %v541, %v432
        %v550 = vadd.bf16 %v542, %v432
        %v551 = vadd.bf16 %v543, %v432
        %v552 = vadd.bf16 %v544, %v432
        %v553 = vadd.bf16 %v545, %v432
        %v554 = vadd.bf16 %v546, %v432
        %v555 = vadd.bf16 %v547, %v432
        %v556 = vadd.bf16 %v548, %v432
        %v557 = vmax.bf16 %v549, 0
        %v558 = vmax.bf16 %v550, 0
        %v559 = vmax.bf16 %v551, 0
        %v560 = vmax.bf16 %v552, 0
        %v561 = vmax.bf16 %v553, 0
        %v562 = vmax.bf16 %v554, 0
        %v563 = vmax.bf16 %v555, 0
        %v564 = vmax.bf16 %v556, 0
        %v565 = vadd.bf16 %v524, %v557
        %v566 = vadd.bf16 %v525, %v558
        %v567 = vadd.bf16 %v526, %v559
        %v568 = vadd.bf16 %v527, %v560
        %v569 = vadd.bf16 %v528, %v561
        %v570 = vadd.bf16 %v529, %v562
        %v571 = vadd.bf16 %v530, %v563
        %v572 = vadd.bf16 %v531, %v564
        %v573 = vld [vmem:[%s3] sm:$0x3]
        %v574 = vld [vmem:[%s4] sm:$0x1]
        %v576 = vlaneseq
        %v577 = vshrl.u32 %v576, 7
        %v578 = vsub.s32 0, %v577
        %v579 = vrot.slane %v574, %v578
        %v589 = vunpack.c.l.b16 %v565
        %v590 = vunpack.c.l.b16 %v566
        %v591 = vunpack.c.l.b16 %v567
        %v592 = vunpack.c.l.b16 %v568
        %v593 = vunpack.c.l.b16 %v569
        %v594 = vunpack.c.l.b16 %v570
        %v595 = vunpack.c.l.b16 %v571
        %v596 = vunpack.c.l.b16 %v572
        %v597 = vpack.c.b16 %v590, %v589
        %v598 = vpack.c.b16 %v592, %v591
        %v599 = vpack.c.b16 %v594, %v593
        %v600 = vpack.c.b16 %v596, %v595
        %vm601 = vcmask 31744
        %v603 = vsel %vm601, %v597, 0
        %v606 = vsel %vm601, %v598, 0
        %v609 = vsel %vm601, %v599, 0
        %v612 = vsel %vm601, %v600, 0
        %vm614 = vcmask 1041408
        %v616 = vsel %vm614, %v573, 0
        %618 = vmatprep.subr.bf16.mxu0 0
        %619 = vmatpush1.bf16.msra.mxu0 %v616
        %620 = vmatprep.subr.bf16.mxu0 0
        %621 = vmatpush1.bf16.msra.mxu0 0
        %622 = vmatprep.subr.bf16.mxu0 0
        %623 = vmatpush1.bf16.msra.mxu0 0
        %624 = vmatprep.subr.bf16.mxu0 0
        %625 = vmatpush1.bf16.msra.mxu0 0
        %626 = vmatprep.subr.bf16.mxu0 0
        %627 = vmatpush1.bf16.msra.mxu0 0
        %628 = vmatprep.subr.bf16.mxu0 0
        %629 = vmatpush1.bf16.msra.mxu0 0
        %630 = vmatprep.subr.bf16.mxu0 0
        %631 = vmatpush1.bf16.msra.mxu0 0
        %632 = vmatprep.subr.bf16.mxu0 0
        %633 = vmatpush1.bf16.msra.mxu0 0
        %634 = vmatprep.subr.bf16.mxu0 0
        %635 = vmatpush1.bf16.msra.mxu0 0
        %636 = vmatprep.subr.bf16.mxu0 0
        %637 = vmatpush1.bf16.msra.mxu0 0
        %638 = vmatprep.subr.bf16.mxu0 0
        %639 = vmatpush1.bf16.msra.mxu0 0
        %640 = vmatprep.subr.bf16.mxu0 0
        %641 = vmatpush1.bf16.msra.mxu0 0
        %642 = vmatprep.subr.bf16.mxu0 0
        %643 = vmatpush1.bf16.msra.mxu0 0
        %644 = vmatprep.subr.bf16.mxu0 0
        %645 = vmatpush1.bf16.msra.mxu0 0
        %646 = vmatprep.subr.bf16.mxu0 0
        %647 = vmatpush1.bf16.msra.mxu0 0
        %648 = vmatprep.subr.bf16.mxu0 0
        %649 = vmatpush1.bf16.msra.mxu0 0
        %650 = vmatprep.mubr.bf16.mxu0 0
        %651 = vmatmul.mubr.bf16.gmra.mrb[0].mxu0 %v603
        %v652 = vpop.f32.mrb[0].mxu0
        %v653 = vadd.f32 %v579, %v652
        %v654 = vpop.f32.mrb[0].mxu0
        %v655 = vpop.f32.mrb[0].mxu0
        %v656 = vadd.f32 %v579, %v655
        %v657 = vpop.f32.mrb[0].mxu0
        %658 = vmatprep.mubr.bf16.mxu0 0
        %659 = vmatmul.mubr.bf16.gmra.mrb[0].mxu0 %v606
        %v660 = vpop.f32.mrb[0].mxu0
        %v661 = vadd.f32 %v579, %v660
        %v662 = vpop.f32.mrb[0].mxu0
        %v663 = vpop.f32.mrb[0].mxu0
        %v664 = vadd.f32 %v579, %v663
        %v665 = vpop.f32.mrb[0].mxu0
        %666 = vmatprep.mubr.bf16.mxu0 0
        %667 = vmatmul.mubr.bf16.gmra.mrb[0].mxu0 %v609
        %v668 = vpop.f32.mrb[0].mxu0
        %v669 = vadd.f32 %v579, %v668
        %v670 = vpop.f32.mrb[0].mxu0
        %v671 = vpop.f32.mrb[0].mxu0
        %v672 = vadd.f32 %v579, %v671
        %v673 = vpop.f32.mrb[0].mxu0
        %674 = vmatprep.mubr.bf16.mxu0 0
        %675 = vmatmul.mubr.bf16.gmra.mrb[0].mxu0 %v612
        %v676 = vpop.f32.mrb[0].mxu0
        %v677 = vadd.f32 %v579, %v676
        %v678 = vpop.f32.mrb[0].mxu0
        %v679 = vpop.f32.mrb[0].mxu0
        %v680 = vadd.f32 %v579, %v679
        %v681 = vpop.f32.mrb[0].mxu0
        %682 = vdwg.mxu0
        %v683 = vpack.c.bf16 %v656, %v653
        %v684 = vpack.c.bf16 %v664, %v661
        %v685 = vpack.c.bf16 %v672, %v669
        %v686 = vpack.c.bf16 %v680, %v677
        %v691 = vunpack.c.l.b16 %v683
        %v692 = vunpack.c.h.b16 %v683
        %v693 = vunpack.c.l.b16 %v684
        %v694 = vunpack.c.h.b16 %v684
        %v695 = vunpack.c.l.b16 %v685
        %v696 = vunpack.c.h.b16 %v685
        %v697 = vunpack.c.l.b16 %v686
        %v698 = vunpack.c.h.b16 %v686
        %v699 = vpack.c.b16 %v691, %v691
        %v700 = vpack.c.b16 %v692, %v692
        %v701 = vpack.c.b16 %v693, %v693
        %v702 = vpack.c.b16 %v694, %v694
        %v703 = vpack.c.b16 %v695, %v695
        %v704 = vpack.c.b16 %v696, %v696
        %v705 = vpack.c.b16 %v697, %v697
        %v706 = vpack.c.b16 %v698, %v698
        %715 = vst [vmem:[%s391] sm:$0xf] %v699
        %716 = vst [vmem:[%s391 + $0x4] sm:$0xf] %v700
        %717 = vst [vmem:[%s391 + $0x8] sm:$0xf] %v701
        %718 = vst [vmem:[%s391 + $0xc] sm:$0xf] %v702
        %719 = vst [vmem:[%s391 + $0x10] sm:$0xf] %v703
        %720 = vst [vmem:[%s391 + $0x14] sm:$0xf] %v704
        %721 = vst [vmem:[%s391 + $0x18] sm:$0xf] %v705
        %722 = vst [vmem:[%s391 + $0x1c] sm:$0xf] %v706
        %s723 = smul.u32 8, %s16
        %p724 = scmp.lt.s32.totalorder %s723, 15
        %s725 = scalar_select %p724, %s723, 15
        %s726 = smul.addr %s725, 4
        %s727 = scalar_lea.vmem %s5, %s726
        // Predicated region
        $region82: #{transition_block_pallas.1} parent=76 // pred_check
          %p728 = pneg %p144
        $region83: #{transition_block_pallas.1} parent=76 // pred_check_branch
          %730 = sbr.rel (%p728) target = $region85
        $region84: #{transition_block_pallas.1} parent=76 // pred_region
          %s731 = smul.u32 8, %s16
        $region85: #{transition_block_pallas.1} parent=76 // pred_fallthru
          _
      $region77: #{transition_block_pallas.1} parent=5 // pred_fallthru
        _
      %p732 = scmp.le.s32.totalorder 2, %s11
      // Predicated region
      $region86: #{transition_block_pallas.1} parent=5 // pred_check
        %p733 = pneg %p732
      $region87: #{transition_block_pallas.1} parent=5 // pred_check_branch
        %735 = sbr.rel (%p733) target = $region89
      $region88: #{transition_block_pallas.1} parent=5 // pred_region
        %s736 = ssub.s32 %s11, 2
        // Predicated region
        $region90: #{transition_block_pallas.1} parent=88 // pred_check
          %p737 = pneg %p150
        $region91: #{transition_block_pallas.1} parent=88 // pred_check_branch
          %739 = sbr.rel (%p737) target = $region93
        $region92: #{transition_block_pallas.1} parent=88 // pred_region
          %s740 = smul.u32 8, %s17
          %p741 = scmp.lt.s32.totalorder %s740, 15
          %s742 = scalar_select %p741, %s740, 15
          %s743 = smul.addr %s742, 4
          %s744 = scalar_lea.vmem %s5, %s743
        $region93: #{transition_block_pallas.1} parent=88 // pred_fallthru
          _
      $region89: #{transition_block_pallas.1} parent=5 // pred_fallthru
        _
    $region6: #{transition_block_pallas.1} parent=1 // loop_footer
      %s15 = sadd.s32 1, %s11
    $region7: #{transition_block_pallas.1} parent=1 // loop_footer_branch
      %10 = sbr.rel target = $region3
    $region8: #{transition_block_pallas.1} parent=1 // loop_exit
      _

</llo_original>
